<compile_context>
chip_gen: v5e
topology: v5e:2x2
jax: 0.10.0
libtpu: 0.0.40
codegen_flags: <defaults>
</compile_context>

<pallas_src>
import functools
import math

import jax
import jax.numpy as jnp
from jax.experimental import pallas as pl
from jax.experimental.pallas import tpu as pltpu


def _wing_loss_kernel(x_ref, y_ref, o_ref, *, weight, w, C, inv_eps,
                      tm, lanes, m_rows, n_per_core, ragged):
    i = pl.program_id(1)

    @pl.when(i == 0)
    def _():
        o_ref[...] = jnp.zeros_like(o_ref)

    x = x_ref[...].astype(jnp.float32)
    y = y_ref[...].astype(jnp.float32)

    ax = jnp.abs((x - y) * jnp.float32(weight))
    small = jnp.float32(w) * jnp.log(1.0 + ax * jnp.float32(inv_eps))
    val = jnp.where(ax < jnp.float32(w), small, ax - jnp.float32(C))

    if ragged:
        # Zero rows that fall beyond the real array (partial tail block, or an
        # extra clamped program on the parallel core axis).  Mask `val`, not
        # `ax`, so garbage data in the unfilled VMEM tail contributes exactly 0.
        c = pl.program_id(0)
        blk = c * n_per_core + i
        row = blk * tm + jax.lax.broadcasted_iota(jnp.int32, (tm, lanes), 0)
        val = jnp.where(row < m_rows, val, jnp.float32(0.0))

    if tm > 8:
        # Fold the (tm, L) tile to one (8, L) slab.  tm % 8 == 0, so the
        # reshape only regroups whole sublane tiles (layout no-op) and the
        # leading-axis sum lowers to elementwise VPU adds.
        val = jnp.sum(val.reshape(tm // 8, 8, lanes), axis=0)

    o_ref[...] += val


def wing_loss(inp, target, *, weight=1.0, w=10.0, eps=2.0):
    assert inp.shape == target.shape
    B = int(inp.shape[0])
    N = int(math.prod(inp.shape))

    xf = inp.reshape(-1)
    yf = target.reshape(-1)

    # Pick a lane width L (multiple of 128) that divides N with M = N/L >= 8
    # so no padding copy is needed for typical tensor sizes.
    L = None
    for cand in (2048, 1024, 512, 256, 128):
        if N % cand == 0 and N // cand >= 8:
            L = cand
            break
    if L is None:
        # Awkward / tiny N: minimal zero-pad of the flat arrays.  Padded
        # entries have x == y -> |diff| = 0 -> w*log(1+0) = 0 contribution.
        L = 128
        Np = -(-N // (8 * L)) * (8 * L)
        xf = jnp.pad(xf, (0, Np - N))
        yf = jnp.pad(yf, (0, Np - N))
        N_eff = Np
    else:
        N_eff = N

    M = N_eff // L
    xf = xf.reshape(M, L)
    yf = yf.reshape(M, L)

    # ~2 MiB (f32) per input block: 2 inputs x 2 pipeline buffers stays well
    # inside the default scoped VMEM on v5e/v6e/v7x while amortizing per-step
    # grid overhead.
    target_rows = max(8, (2 * 1024 * 1024) // (4 * L))
    TM = max(8, min(target_rows, (M // 8) * 8))

    n_blocks = -(-M // TM)
    NCORES = 2  # megacore-friendly on v7x; harmless sequential split on v5e/v6e
    n_per_core = -(-n_blocks // NCORES)
    grid = (NCORES, n_per_core)
    ragged = (M % TM != 0) or (n_blocks != NCORES * n_per_core)
    last_block = n_blocks - 1

    def in_map(c, i):
        blk = c * n_per_core + i
        # Clamp so an (at most one) surplus program re-reads a valid block;
        # its rows are fully masked inside the kernel.
        return (jnp.minimum(blk, last_block), 0)

    kernel = functools.partial(
        _wing_loss_kernel,
        weight=float(weight),
        w=float(w),
        C=float(1.0 - math.log(1.0 + float(w) / float(eps))),
        inv_eps=float(1.0 / float(eps)),
        tm=TM,
        lanes=L,
        m_rows=M,
        n_per_core=n_per_core,
        ragged=ragged,
    )

    partials = pl.pallas_call(
        kernel,
        out_shape=jax.ShapeDtypeStruct((NCORES, 8, L), jnp.float32),
        grid_spec=pltpu.PrefetchScalarGridSpec(
            num_scalar_prefetch=0,
            grid=grid,
            in_specs=[
                pl.BlockSpec((TM, L), in_map),
                pl.BlockSpec((TM, L), in_map),
            ],
            out_specs=pl.BlockSpec((None, 8, L), lambda c, i: (c, 0, 0)),
        ),
        compiler_params=pltpu.CompilerParams(
            dimension_semantics=("parallel", "arbitrary"),
        ),
    )(xf, yf)

    # Tiny final reduction + mean-over-batch outside the kernel.
    return jnp.sum(partials) / jnp.float32(B)


def wing_loss_ref(inp, target, *, weight=1.0, w=10.0, eps=2.0):
    B = inp.shape[0]
    x = inp.reshape(B, -1).astype(jnp.float32)
    y = target.reshape(B, -1).astype(jnp.float32)
    d = jnp.abs((x - y) * weight)
    C = 1.0 - jnp.log(1.0 + w / eps)
    val = jnp.where(d < w, w * jnp.log(1.0 + d / eps), d - C)
    return jnp.mean(jnp.sum(val, axis=-1))


if __name__ == "__main__":
    key = jax.random.PRNGKey(0)
    k1, k2 = jax.random.split(key)
    # layout: NCHW, matching the PyTorch module's expected input
    B, C, H, W = 2, 4, 16, 16
    inp = jax.random.normal(k1, (B, C, H, W), dtype=jnp.float32) * 8.0
    tgt = jax.random.normal(k2, (B, C, H, W), dtype=jnp.float32) * 8.0

    out = wing_loss(inp, tgt, weight=1.0, w=10.0, eps=2.0)
    out = jax.block_until_ready(out)

    ref = wing_loss_ref(inp, tgt, weight=1.0, w=10.0, eps=2.0)
    assert jnp.allclose(out, ref, rtol=1e-5, atol=1e-5), (out, ref)
    print("KERNEL_OK")
</pallas_src>

<mosaic_0001>
module attributes {stable_mosaic.version = 11 : i64} {
  func.func @_wing_loss_kernel(%arg0: i32, %arg1: i32, %arg2: memref<8x256xf32, #tpu.memory_space<vmem>>, %arg3: memref<8x256xf32, #tpu.memory_space<vmem>>, %arg4: memref<1x8x256xf32, #tpu.memory_space<vmem>>) attributes {dimension_semantics = [#tpu.dimension_semantics<parallel>, #tpu.dimension_semantics<arbitrary>], iteration_bounds = array<i64: 2, 1>, scalar_prefetch = 0 : i64, scratch_operands = 0 : i64, tpu.core_type = #tpu.core_type<tc>, window_params = [{transform_indices = @transform_0, window_bounds = array<i64: 8, 256>}, {transform_indices = @transform_1, window_bounds = array<i64: 8, 256>}, {transform_indices = @transform_2, window_bounds = array<i64: 1, 8, 256>}]} {
    %c0_i32 = arith.constant 0 : i32
    %0 = arith.cmpi eq, %arg1, %c0_i32 : i32
    %1 = arith.extui %0 : i1 to i32
    %c0_i32_0 = arith.constant 0 : i32
    %2 = arith.cmpi ne, %1, %c0_i32_0 : i32
    scf.if %2 {
      %cst_17 = arith.constant 0.000000e+00 : f32
      %37 = vector.broadcast %cst_17 : f32 to vector<8x256xf32>
      %c0_18 = arith.constant 0 : index
      %c0_19 = arith.constant 0 : index
      %c0_20 = arith.constant 0 : index
      %38 = vector.load %arg4[%c0_18, %c0_19, %c0_20] : memref<1x8x256xf32, #tpu.memory_space<vmem>>, vector<1x8x256xf32>
      %39 = vector.shape_cast %38 : vector<1x8x256xf32> to vector<8x256xf32>
      %40 = vector.shape_cast %37 : vector<8x256xf32> to vector<1x8x256xf32>
      tpu.vector_store %arg4[%c0_18, %c0_19, %c0_20], %40 {strides = array<i32>} : memref<1x8x256xf32, #tpu.memory_space<vmem>>, vector<1x8x256xf32>,
    } else {
    }
    %c0 = arith.constant 0 : index
    %c0_1 = arith.constant 0 : index
    %3 = vector.load %arg2[%c0, %c0_1] : memref<8x256xf32, #tpu.memory_space<vmem>>, vector<8x256xf32>
    %c0_2 = arith.constant 0 : index
    %c0_3 = arith.constant 0 : index
    %4 = vector.load %arg3[%c0_2, %c0_3] : memref<8x256xf32, #tpu.memory_space<vmem>>, vector<8x256xf32>
    %5 = arith.subf %3, %4 : vector<8x256xf32>
    %cst = arith.constant 1.000000e+00 : f32
    %6 = vector.broadcast %cst : f32 to vector<8x256xf32>
    %7 = arith.mulf %5, %6 : vector<8x256xf32>
    %8 = math.absf %7 : vector<8x256xf32>
    %cst_4 = arith.constant 5.000000e-01 : f32
    %9 = vector.broadcast %cst_4 : f32 to vector<8x256xf32>
    %10 = arith.mulf %8, %9 : vector<8x256xf32>
    %cst_5 = arith.constant 1.000000e+00 : f32
    %11 = vector.broadcast %cst_5 : f32 to vector<8x256xf32>
    %12 = arith.addf %11, %10 : vector<8x256xf32>
    %13 = math.log %12 : vector<8x256xf32>
    %cst_6 = arith.constant 1.000000e+01 : f32
    %14 = vector.broadcast %cst_6 : f32 to vector<8x256xf32>
    %15 = arith.mulf %14, %13 : vector<8x256xf32>
    %cst_7 = arith.constant 1.000000e+01 : f32
    %16 = vector.broadcast %cst_7 : f32 to vector<8x256xf32>
    %17 = arith.cmpf olt, %8, %16 : vector<8x256xf32>
    %cst_8 = arith.constant -0.79175949 : f32
    %18 = vector.broadcast %cst_8 : f32 to vector<8x256xf32>
    %19 = arith.subf %8, %18 : vector<8x256xf32>
    %20 = arith.select %17, %15, %19 : vector<8x256xi1>, vector<8x256xf32>
    %c1_i32 = arith.constant 1 : i32
    %21 = arith.muli %arg0, %c1_i32 : i32
    %22 = arith.addi %21, %arg1 : i32
    %c8_i32 = arith.constant 8 : i32
    %23 = arith.muli %22, %c8_i32 : i32
    %24 = tpu.iota {dimensions = array<i32: 0>} : vector<8x256xi32>
    %25 = vector.broadcast %23 : i32 to vector<8x256xi32>
    %26 = arith.addi %25, %24 : vector<8x256xi32>
    %c8_i32_9 = arith.constant 8 : i32
    %27 = vector.broadcast %c8_i32_9 : i32 to vector<8x256xi32>
    %28 = arith.cmpi slt, %26, %27 : vector<8x256xi32>
    %cst_10 = arith.constant 0.000000e+00 : f32
    %29 = vector.broadcast %cst_10 : f32 to vector<8x256xf32>
    %30 = arith.select %28, %20, %29 : vector<8x256xi1>, vector<8x256xf32>
    %c0_11 = arith.constant 0 : index
    %c0_12 = arith.constant 0 : index
    %c0_13 = arith.constant 0 : index
    %31 = vector.load %arg4[%c0_11, %c0_12, %c0_13] : memref<1x8x256xf32, #tpu.memory_space<vmem>>, vector<1x8x256xf32>
    %32 = vector.shape_cast %31 : vector<1x8x256xf32> to vector<8x256xf32>
    %33 = arith.addf %32, %30 : vector<8x256xf32>
    %c0_14 = arith.constant 0 : index
    %c0_15 = arith.constant 0 : index
    %c0_16 = arith.constant 0 : index
    %34 = vector.load %arg4[%c0_14, %c0_15, %c0_16] : memref<1x8x256xf32, #tpu.memory_space<vmem>>, vector<1x8x256xf32>
    %35 = vector.shape_cast %34 : vector<1x8x256xf32> to vector<8x256xf32>
    %36 = vector.shape_cast %33 : vector<8x256xf32> to vector<1x8x256xf32>
    tpu.vector_store %arg4[%c0_14, %c0_15, %c0_16], %36 {strides = array<i32>} : memref<1x8x256xf32, #tpu.memory_space<vmem>>, vector<1x8x256xf32>,
    return
  }
  func.func @transform_0(%arg0: i32, %arg1: i32) -> (i32, i32) {
    %c1_i32 = arith.constant 1 : i32
    %0 = arith.muli %arg0, %c1_i32 : i32
    %1 = arith.addi %0, %arg1 : i32
    %c0_i32 = arith.constant 0 : i32
    %2 = arith.minsi %1, %c0_i32 : i32
    %c0_i32_0 = arith.constant 0 : i32
    %c0_i32_1 = arith.constant 0 : i32
    return %2, %c0_i32_0 : i32, i32
  }
  func.func @transform_1(%arg0: i32, %arg1: i32) -> (i32, i32) {
    %c1_i32 = arith.constant 1 : i32
    %0 = arith.muli %arg0, %c1_i32 : i32
    %1 = arith.addi %0, %arg1 : i32
    %c0_i32 = arith.constant 0 : i32
    %2 = arith.minsi %1, %c0_i32 : i32
    %c0_i32_0 = arith.constant 0 : i32
    %c0_i32_1 = arith.constant 0 : i32
    return %2, %c0_i32_0 : i32, i32
  }
  func.func @transform_2(%arg0: i32, %arg1: i32) -> (i32, i32, i32) {
    %c0_i32 = arith.constant 0 : i32
    %c0_i32_0 = arith.constant 0 : i32
    %c0_i32_1 = arith.constant 0 : i32
    return %arg0, %c0_i32, %c0_i32_0 : i32, i32, i32
  }
}

</mosaic_0001>

<llo_original>
// kernel: tpu_custom_call.1
$region0: #{tpu_custom_call.1}
  #allocation0 [shape = 'u32[]', space=smem, size = 0x4, offset = 0x4, fixed_abs, tag = 'smem constant byte address 0x4 - core index']
  #allocation1 [shape = 'u32[72,128]{1,0:T(1,128)}', space=vmem, size = 0x9000, scoped, tag = 'internal scratch']
  %s0 = inlined_call_operand.hbm [shape: f32[8,256], index: 0, kind: input, shape index: {}]
  %s1 = inlined_call_operand.hbm [shape: f32[8,256], index: 1, kind: input, shape index: {}]
  %s2 = inlined_call_operand.hbm [shape: f32[2,8,256], index: 2, kind: output, shape index: {}]
  %s3 = sld [smem:[#allocation0]]
  $region53: #{tpu_custom_call.1} parent=0
    _
  %s5 = ssub.s32 1, %s3
  %s6 = scalar_select 0, %s5, %s3
  $region1: #{tpu_custom_call.1} parent=0
    #allocation2 [shape = 'u8[16384]{0}', space=vmem, size = 0x4000, scoped, tag = 'input window, operand 0']
    #allocation3 [shape = 's32[2]{0}', space=sflag, size = 0x8, scoped, tag = 'scoped memory for tpu_custom_call.1']
    #allocation4 [shape = 's32[2]{0}', space=sflag, size = 0x8, scoped, tag = 'scoped memory for tpu_custom_call.1']
    #allocation5 [shape = 'u8[16384]{0}', space=vmem, size = 0x4000, scoped, tag = 'input window, operand 1']
    #allocation6 [shape = 's32[2]{0}', space=sflag, size = 0x8, scoped, tag = 'scoped memory for tpu_custom_call.1']
    #allocation7 [shape = 'u8[16384]{0}', space=vmem, size = 0x4000, scoped, tag = 'output window, operand 0']
    %7 = vsyncpa [#allocation3], 0
    %s8 = scalar_lea.sflag [#allocation3], 1
    %9 = vsyncpa %s8, 0
    %10 = vsyncpa [#allocation6], 0
    %s11 = scalar_lea.sflag [#allocation6], 1
    %12 = vsyncpa %s11, 0
    %13 = vsyncpa [#allocation4], 0
    %s14 = scalar_lea.sflag [#allocation4], 1
    %15 = vsyncpa %s14, 0
    loop: start=0, step=1, limit=4
    $region2: #{tpu_custom_call.1} parent=1 // loop_pre_header
      _
    $region3: #{tpu_custom_call.1} parent=1 // loop_header
      %s17 = sphi 0, %s21
      %p18 = scmp.ge.s32.totalorder %s17, 4
      %s24 = sphi 0, %s36
      %s25 = sphi 0, %s32
      %s26 = sphi 0, %s24
      %s27 = sphi 0, %s25
      %s28 = sphi 0, %s26
      %s29 = sphi 0, %s27
      %s45 = sphi 0, %s47
      %s48 = sphi 0, %s45
      %s49 = sphi 0, %s48
      %s65 = sphi 0, %s49
      %s77 = sphi 0, %s79
      %s80 = sphi 0, %s77
      %s81 = sphi 0, %s80
      %s97 = sphi 0, %s81
      %s103 = sphi 0, %s105
      %s106 = sphi 0, %s103
      %s107 = sphi 0, %s106
      %s123 = sphi 0, %s107
    $region4: #{tpu_custom_call.1} parent=1 // loop_header_branch
      %20 = sbr.rel (%p18) target = $region8
    $region5: #{tpu_custom_call.1} parent=1 // loop_body
      %s22 = ssub.s32 %s17, 1
      %s23 = ssub.s32 %s17, 2
      %s30 = sadd.s32 1, %s25
      %p31 = scmp.ge.s32.totalorder %s30, 1
      %s32 = scalar_select %p31, 0, %s30
      %s33 = sadd.s32 1, %s24
      %s34 = scalar_select %p31, %s33, %s24
      %p35 = scmp.ge.s32.totalorder %s34, 2
      %s36 = scalar_select %p35, 0, %s34
      %s37 = sadd.s32 %s24, %s25
      %p38 = scmp.lt.s32.totalorder %s37, 0
      %s39 = scalar_select %p38, %s37, 0
      %s40 = sadd.s32 %s36, %s32
      %p41 = scmp.lt.s32.totalorder %s40, 0
      %s42 = scalar_select %p41, %s40, 0
      %s43 = ssub.s32 %s39, %s42
      %p44 = scmp.eq.s32.totalorder %s43, 0
      %s46 = sadd.s32 %s45, 1
      %s47 = scalar_select %p44, %s45, %s46
      %p50 = pneg %p44
      %p51 = scmp.eq.s32.totalorder %s17, 1
      %p52 = por %p50, %p51
      %p53 = scmp.ne.s32.totalorder %s45, %s48
      %p54 = scmp.eq.s32.totalorder %s17, 0
      %p55 = por %p53, %p54
      %p56 = scmp.ne.s32.totalorder %s45, %s48
      %p57 = scmp.eq.s32.totalorder %s22, 1
      %p58 = por %p56, %p57
      %p59 = scmp.ne.s32.totalorder %s48, %s49
      %p60 = scmp.eq.s32.totalorder %s22, 0
      %p61 = por %p59, %p60
      %p62 = scmp.ne.s32.totalorder %s48, %s49
      %p63 = scmp.eq.s32.totalorder %s23, 1
      %p64 = por %p62, %p63
      %p66 = scmp.ne.s32.totalorder %s49, %s65
      %p67 = scmp.eq.s32.totalorder %s23, 0
      %p68 = por %p66, %p67
      %s69 = sadd.s32 %s24, %s25
      %p70 = scmp.lt.s32.totalorder %s69, 0
      %s71 = scalar_select %p70, %s69, 0
      %s72 = sadd.s32 %s36, %s32
      %p73 = scmp.lt.s32.totalorder %s72, 0
      %s74 = scalar_select %p73, %s72, 0
      %s75 = ssub.s32 %s71, %s74
      %p76 = scmp.eq.s32.totalorder %s75, 0
      %s78 = sadd.s32 %s77, 1
      %s79 = scalar_select %p76, %s77, %s78
      %p82 = pneg %p76
      %p83 = scmp.eq.s32.totalorder %s17, 1
      %p84 = por %p82, %p83
      %p85 = scmp.ne.s32.totalorder %s77, %s80
      %p86 = scmp.eq.s32.totalorder %s17, 0
      %p87 = por %p85, %p86
      %p88 = scmp.ne.s32.totalorder %s77, %s80
      %p89 = scmp.eq.s32.totalorder %s22, 1
      %p90 = por %p88, %p89
      %p91 = scmp.ne.s32.totalorder %s80, %s81
      %p92 = scmp.eq.s32.totalorder %s22, 0
      %p93 = por %p91, %p92
      %p94 = scmp.ne.s32.totalorder %s80, %s81
      %p95 = scmp.eq.s32.totalorder %s23, 1
      %p96 = por %p94, %p95
      %p98 = scmp.ne.s32.totalorder %s81, %s97
      %p99 = scmp.eq.s32.totalorder %s23, 0
      %p100 = por %p98, %p99
      %s101 = ssub.s32 %s24, %s36
      %p102 = scmp.eq.s32.totalorder %s101, 0
      %s104 = sadd.s32 %s103, 1
      %s105 = scalar_select %p102, %s103, %s104
      %p108 = pneg %p102
      %p109 = scmp.eq.s32.totalorder %s17, 1
      %p110 = por %p108, %p109
      %p111 = scmp.ne.s32.totalorder %s103, %s106
      %p112 = scmp.eq.s32.totalorder %s17, 0
      %p113 = por %p111, %p112
      %p114 = scmp.ne.s32.totalorder %s103, %s106
      %p115 = scmp.eq.s32.totalorder %s22, 1
      %p116 = por %p114, %p115
      %p117 = scmp.ne.s32.totalorder %s106, %s107
      %p118 = scmp.eq.s32.totalorder %s22, 0
      %p119 = por %p117, %p118
      %p120 = scmp.ne.s32.totalorder %s106, %s107
      %p121 = scmp.eq.s32.totalorder %s23, 1
      %p122 = por %p120, %p121
      %p124 = scmp.ne.s32.totalorder %s107, %s123
      %p125 = scmp.eq.s32.totalorder %s23, 0
      %p126 = por %p124, %p125
      %p127 = scmp.le.s32.totalorder 1, %s17
      %p128 = scmp.lt.s32.totalorder %s17, 3
      %p129 = pnand %p127, %p128
      %p130 = pneg %p129
      // Predicated region
      $region9: #{tpu_custom_call.1} parent=5 // pred_check
        _
      $region10: #{tpu_custom_call.1} parent=5 // pred_check_branch
        %132 = sbr.rel (%p129) target = $region12
      $region11: #{tpu_custom_call.1} parent=5 // pred_region
        %s133 = ssub.s32 %s17, 1
      $region12: #{tpu_custom_call.1} parent=5 // pred_fallthru
        _
      %p134 = scmp.lt.s32.totalorder %s17, 2
      // Predicated region
      $region13: #{tpu_custom_call.1} parent=5 // pred_check
        %p135 = pneg %p134
      $region14: #{tpu_custom_call.1} parent=5 // pred_check_branch
        %137 = sbr.rel (%p135) target = $region16
      $region15: #{tpu_custom_call.1} parent=5 // pred_region
        // Predicated region
        $region17: #{tpu_custom_call.1} parent=15 // pred_check
          %p138 = pneg %p55
        $region18: #{tpu_custom_call.1} parent=15 // pred_check_branch
          %140 = sbr.rel (%p138) target = $region20
        $region19: #{tpu_custom_call.1} parent=15 // pred_region
          %s141 = sand.u32 %s45, 1
          %s142 = scalar_lea.sflag [#allocation3], %s141
          %s143 = sand.u32 %s45, 1
          %s144 = smul.addr %s143, 16
          %s145 = scalar_lea.vmem [#allocation2], %s144
          %s146 = sadd.s32 %s24, %s25
          %p147 = scmp.lt.s32.totalorder %s146, 0
          %s148 = scalar_select %p147, %s146, 0
          %150 = vsyncadd %s142, 0
          %s151 = smul.addr %s148, 2
          %s152 = smul.addr %s151, 8
          %s153 = scalar_lea.hbm %s0, %s152
          %s155 = sshll.u32 %s153, 4
          %s156 = int_to_ptr.hbm [resolvable:$true] %s155
          %s157 = sshll.u32 %s145, 4
          %s158 = int_to_ptr.vmem [resolvable:$true] %s157
          %160 = dma.hbm_to_vmem [thread:$0]  %s156, 256, %s158, %s142
        $region20: #{tpu_custom_call.1} parent=15 // pred_fallthru
          _
        // Predicated region
        $region21: #{tpu_custom_call.1} parent=15 // pred_check
          %p161 = pneg %p87
        $region22: #{tpu_custom_call.1} parent=15 // pred_check_branch
          %163 = sbr.rel (%p161) target = $region24
        $region23: #{tpu_custom_call.1} parent=15 // pred_region
          %s164 = sand.u32 %s77, 1
          %s165 = scalar_lea.sflag [#allocation6], %s164
          %s166 = sand.u32 %s77, 1
          %s167 = smul.addr %s166, 16
          %s168 = scalar_lea.vmem [#allocation5], %s167
          %s169 = sadd.s32 %s24, %s25
          %p170 = scmp.lt.s32.totalorder %s169, 0
          %s171 = scalar_select %p170, %s169, 0
          %173 = vsyncadd %s165, 0
          %s174 = smul.addr %s171, 2
          %s175 = smul.addr %s174, 8
          %s176 = scalar_lea.hbm %s1, %s175
          %s178 = sshll.u32 %s176, 4
          %s179 = int_to_ptr.hbm [resolvable:$true] %s178
          %s180 = sshll.u32 %s168, 4
          %s181 = int_to_ptr.vmem [resolvable:$true] %s180
          %183 = dma.hbm_to_vmem [thread:$0]  %s179, 256, %s181, %s165
        $region24: #{tpu_custom_call.1} parent=15 // pred_fallthru
          _
      $region16: #{tpu_custom_call.1} parent=5 // pred_fallthru
        _
      %p184 = scmp.le.s32.totalorder 1, %s17
      %p185 = scmp.lt.s32.totalorder %s17, 3
      %p186 = pnand %p184, %p185
      %p187 = pneg %p186
      // Predicated region
      $region25: #{tpu_custom_call.1} parent=5 // pred_check
        _
      $region26: #{tpu_custom_call.1} parent=5 // pred_check_branch
        %189 = sbr.rel (%p186) target = $region28
      $region27: #{tpu_custom_call.1} parent=5 // pred_region
        %s190 = ssub.s32 %s17, 1
        %s191 = sand.u32 %s48, 1
        %s192 = scalar_lea.sflag [#allocation3], %s191
        %s193 = sand.u32 %s48, 1
        %s194 = smul.addr %s193, 16
        %s195 = scalar_lea.vmem [#allocation2], %s194
        // Predicated region
        $region29: #{tpu_custom_call.1} parent=27 // pred_check
          %p196 = pneg %p61
        $region30: #{tpu_custom_call.1} parent=27 // pred_check_branch
          %198 = sbr.rel (%p196) target = $region32
        $region31: #{tpu_custom_call.1} parent=27 // pred_region
          %200 = dma.done %s192, 256
        $region32: #{tpu_custom_call.1} parent=27 // pred_fallthru
          _
        %s201 = sand.u32 %s80, 1
        %s202 = scalar_lea.sflag [#allocation6], %s201
        %s203 = sand.u32 %s80, 1
        %s204 = smul.addr %s203, 16
        %s205 = scalar_lea.vmem [#allocation5], %s204
        // Predicated region
        $region33: #{tpu_custom_call.1} parent=27 // pred_check
          %p206 = pneg %p93
        $region34: #{tpu_custom_call.1} parent=27 // pred_check_branch
          %208 = sbr.rel (%p206) target = $region36
        $region35: #{tpu_custom_call.1} parent=27 // pred_region
          %210 = dma.done %s202, 256
        $region36: #{tpu_custom_call.1} parent=27 // pred_fallthru
          _
        %s211 = sand.u32 %s48, 1
        %s212 = scalar_lea.sflag [#allocation3], %s211
        %s213 = sand.u32 %s48, 1
        %s214 = smul.addr %s213, 16
        %s215 = scalar_lea.vmem [#allocation2], %s214
        %p216 = pneg %p61
        %p217 = pneg %p58
        %s218 = sand.u32 %s80, 1
        %s219 = scalar_lea.sflag [#allocation6], %s218
        %s220 = sand.u32 %s80, 1
        %s221 = smul.addr %s220, 16
        %s222 = scalar_lea.vmem [#allocation5], %s221
        %p223 = pneg %p93
        %p224 = pneg %p90
        %p225 = pneg %p119
        %p226 = pneg %p116
        %s227 = sand.u32 %s106, 1
        %s228 = scalar_lea.sflag [#allocation4], %s227
        %s229 = sand.u32 %s106, 1
        %s230 = smul.addr %s229, 16
        %s231 = scalar_lea.vmem [#allocation7], %s230
        %s232 = sadd.s32 %s26, %s27
        %p233 = scmp.lt.s32.totalorder %s232, 0
        %s234 = scalar_select %p233, %s232, 0
        %s235 = sadd.s32 %s26, %s27
        %p236 = scmp.lt.s32.totalorder %s235, 0
        %s237 = scalar_select %p236, %s235, 0
        %p238 = scmp.eq.s32.totalorder %s27, 0
        // Predicated region
        $region37: #{tpu_custom_call.1} parent=27 // pred_check
          %p239 = pneg %p238
        $region38: #{tpu_custom_call.1} parent=27 // pred_check_branch
          %241 = sbr.rel (%p239) target = $region40
        $region39: #{tpu_custom_call.1} parent=27 // pred_region
          %242 = vst [vmem:[%s231] sm:$0xff] 0.0
          %243 = vst [vmem:[%s231 + $0x8] sm:$0xff] 0.0
        $region40: #{tpu_custom_call.1} parent=27 // pred_fallthru
          _
        %v244 = vld [vmem:[%s195] sm:$0xff]
        %v245 = vld [vmem:[%s195 + $0x8] sm:$0xff]
        %v246 = vld [vmem:[%s205] sm:$0xff]
        %v247 = vld [vmem:[%s205 + $0x8] sm:$0xff]
        %v248 = vsub.f32 %v244, %v246
        %v249 = vsub.f32 %v245, %v247
        %v250 = vand.u32 2147483647, %v248
        %v251 = vand.u32 2147483647, %v249
        %v252 = vmul.f32 %v250, 0.5
        %v253 = vmul.f32 %v251, 0.5
        %v254 = vadd.f32 %v252, 1.0
        %v255 = vadd.f32 %v253, 1.0
        %v256 = vlog2.pop %v254
        %v257 = vmul.f32 %v256, 0.6931472
        %v258 = vlog2.pop %v255
        %v259 = vmul.f32 %v258, 0.6931472
        %v260 = vmul.f32 %v257, 10.0
        %v261 = vmul.f32 %v259, 10.0
        %vm262 = vcmp.lt.f32.partialorder %v250, 10.0
        %vm263 = vcmp.lt.f32.partialorder %v251, 10.0
        %v264 = vsub.f32 %v250, -0.7917595
        %v265 = vsub.f32 %v251, -0.7917595
        %v266 = vsel %vm262, %v260, %v264
        %v267 = vsel %vm263, %v261, %v265
        %s268 = sadd.s32 %s26, %s27
        %s269 = smul.u32 %s268, 8
        %v270 = vlaneseq
        %v271 = vshrl.u32 %v270, 7
        %v272 = vstv %s269
        %v273 = vadd.s32 %v272, %v271
        %vm274 = vcmp.lt.s32.totalorder %v273, 8
        %v275 = vsel %vm274, %v266, 0.0
        %v276 = vsel %vm274, %v267, 0.0
        %v277 = vld [vmem:[%s231] sm:$0xff]
        %v278 = vld [vmem:[%s231 + $0x8] sm:$0xff]
        %v279 = vadd.f32 %v277, %v275
        %v280 = vadd.f32 %v278, %v276
        %281 = vst [vmem:[%s231] sm:$0xff] %v279
        %282 = vst [vmem:[%s231 + $0x8] sm:$0xff] %v280
        %s283 = sand.u32 %s106, 1
        %s284 = scalar_lea.sflag [#allocation4], %s283
        %s285 = sand.u32 %s106, 1
        %s286 = smul.addr %s285, 16
        %s287 = scalar_lea.vmem [#allocation7], %s286
        // Predicated region
        $region41: #{tpu_custom_call.1} parent=27 // pred_check
          %p288 = pneg %p116
        $region42: #{tpu_custom_call.1} parent=27 // pred_check_branch
          %290 = sbr.rel (%p288) target = $region44
        $region43: #{tpu_custom_call.1} parent=27 // pred_region
          %292 = vsyncadd %s284, 0
          %s293 = smul.addr %s26, 2
          %s294 = smul.addr %s293, 8
          %s295 = scalar_lea.hbm %s2, %s294
          %s297 = sshll.u32 %s287, 4
          %s298 = int_to_ptr.vmem [resolvable:$true] %s297
          %s299 = sshll.u32 %s295, 4
          %s300 = int_to_ptr.hbm [resolvable:$true] %s299
          %302 = dma.vmem_to_hbm [thread:$0]  %s298, 256, %s300, %s284
        $region44: #{tpu_custom_call.1} parent=27 // pred_fallthru
          _
      $region28: #{tpu_custom_call.1} parent=5 // pred_fallthru
        _
      %p303 = scmp.le.s32.totalorder 2, %s17
      // Predicated region
      $region45: #{tpu_custom_call.1} parent=5 // pred_check
        %p304 = pneg %p303
      $region46: #{tpu_custom_call.1} parent=5 // pred_check_branch
        %306 = sbr.rel (%p304) target = $region48
      $region47: #{tpu_custom_call.1} parent=5 // pred_region
        %s307 = ssub.s32 %s17, 2
        // Predicated region
        $region49: #{tpu_custom_call.1} parent=47 // pred_check
          %p308 = pneg %p122
        $region50: #{tpu_custom_call.1} parent=47 // pred_check_branch
          %310 = sbr.rel (%p308) target = $region52
        $region51: #{tpu_custom_call.1} parent=47 // pred_region
          %s311 = sand.u32 %s107, 1
          %s312 = scalar_lea.sflag [#allocation4], %s311
          %s313 = sand.u32 %s107, 1
          %s314 = smul.addr %s313, 16
          %s315 = scalar_lea.vmem [#allocation7], %s314
          %317 = dma.done %s312, 256
        $region52: #{tpu_custom_call.1} parent=47 // pred_fallthru
          _
      $region48: #{tpu_custom_call.1} parent=5 // pred_fallthru
        _
    $region6: #{tpu_custom_call.1} parent=1 // loop_footer
      %s21 = sadd.s32 1, %s17
    $region7: #{tpu_custom_call.1} parent=1 // loop_footer_branch
      %16 = sbr.rel target = $region3
    $region8: #{tpu_custom_call.1} parent=1 // loop_exit
      _
    %318 = vsyncpa [#allocation3], 1
    %s319 = scalar_lea.sflag [#allocation3], 1
    %320 = vsyncpa %s319, 1
    %321 = vsyncpa [#allocation6], 1
    %s322 = scalar_lea.sflag [#allocation6], 1
    %323 = vsyncpa %s322, 1
    %324 = vsyncpa [#allocation4], 1
    %s325 = scalar_lea.sflag [#allocation4], 1
    %326 = vsyncpa %s325, 1

</llo_original>
